<compile_context>
chip_gen: v7x
topology: tpu7x:2x2x1
jax: 0.10.0
libtpu: 0.0.40
codegen_flags: <defaults>
</compile_context>

<pallas_src>
import jax
import jax.numpy as jnp
from jax.experimental import pallas as pl
from jax.experimental.pallas import tpu as pltpu


def _round_up(a, b):
    return (a + b - 1) // b * b


def _make_vpu_kernel(cin, cout):
    """Small-head path: unrolled VPU MAC over Cin, full-width (Cout, T) ops."""

    def kernel(x_ref, w_ref, b_ref, o_ref):
        # x_ref: (1, Cin, T) VMEM   w_ref: (Cout, Cin) VMEM
        # b_ref: (Cout, 1) VMEM     o_ref: (1, Cout, T) VMEM
        t = x_ref.shape[-1]
        x = x_ref[0].astype(jnp.float32)                       # (Cin, T)
        w = w_ref[...].astype(jnp.float32)                     # (Cout, Cin)
        acc = jnp.broadcast_to(b_ref[...].astype(jnp.float32), (cout, t))
        for c in range(cin):
            # (Cout,1) * (1,T) outer-product broadcast -> (Cout, T) VPU FMA.
            acc = acc + w[:, c:c + 1] * x[c:c + 1, :]
        o_ref[0] = acc.astype(o_ref.dtype)

    return kernel


def _mxu_kernel(x_ref, w_ref, b_ref, o_ref):
    """Large-head path: (Cout, Cin) @ (Cin, T) on the MXU with f32 accumulation."""
    out = jax.lax.dot_general(
        w_ref[...], x_ref[0],
        dimension_numbers=(((1,), (0,)), ((), ())),
        preferred_element_type=jnp.float32)
    o_ref[0] = (out + b_ref[...].astype(jnp.float32)).astype(o_ref.dtype)


def detect_forward(x_nchw, weight, bias, *, tile_hw=None):
    """Equivalent of Detect.forward: conv2d(1x1, bias=True) then permute(0,2,3,1).

    x_nchw: (N, Cin, H, W)
    weight: (Cout, Cin) or (Cout, Cin, 1, 1)
    bias:   (Cout,)
    returns (N, H, W, Cout)
    """
    N, Cin, H, W = x_nchw.shape
    weight = weight.reshape(weight.shape[0], -1)           # (Cout, Cin)
    Cout = weight.shape[0]
    assert weight.shape == (Cout, Cin)
    HW = H * W
    itemsize = jnp.dtype(x_nchw.dtype).itemsize

    # Free metadata reshape: stays channel-major, spatial flattened onto lanes.
    x = x_nchw.reshape(N, Cin, HW)

    # Spatial tile: multiple of 128 lanes, sized so one in+out block pair is a
    # few MiB (amortize per-step overhead) but never larger than the problem.
    if tile_hw is None:
        target_bytes = 2 << 20
        tile_hw = max(512, target_bytes // max(1, (Cin + Cout) * itemsize))
    T = _round_up(min(tile_hw, HW), 128)
    T = min(T, 1 << 16)

    grid = (N, pl.cdiv(HW, T))

    # Double-buffered input + output blocks plus headroom; safe on all chips.
    block_bytes = (Cin + Cout) * T * itemsize
    vmem_limit = int(min(48 << 20, max(8 << 20, 4 * block_bytes)))

    cost = pl.CostEstimate(
        flops=2 * N * HW * Cin * Cout,
        transcendentals=0,
        bytes_accessed=int((N * Cin * HW + N * Cout * HW) * itemsize
                           + (Cin * Cout + Cout) * 4),
    )

    x_spec = pl.BlockSpec((1, Cin, T), lambda n, t: (n, 0, t))
    w_spec = pl.BlockSpec((Cout, Cin), lambda n, t: (0, 0))
    b_spec = pl.BlockSpec((Cout, 1), lambda n, t: (0, 0))
    out_spec = pl.BlockSpec((1, Cout, T), lambda n, t: (n, 0, t))

    if Cin * Cout <= 256:
        # Tiny head (the Detect case): memory-bound, keep it off the MXU.
        kernel = _make_vpu_kernel(Cin, Cout)
    else:
        kernel = _mxu_kernel

    out_cmajor = pl.pallas_call(
        kernel,
        out_shape=jax.ShapeDtypeStruct((N, Cout, HW), x_nchw.dtype),
        grid=grid,
        in_specs=[x_spec, w_spec, b_spec],
        out_specs=out_spec,
        compiler_params=pltpu.CompilerParams(
            dimension_semantics=("parallel", "parallel"),
            vmem_limit_bytes=vmem_limit,
        ),
        cost_estimate=cost,
    )(x, weight, bias.reshape(Cout, 1))

    # Glue: restore (H, W) and apply the module's permute on the small output.
    out = out_cmajor.reshape(N, Cout, H, W)
    return jnp.transpose(out, (0, 2, 3, 1))


if __name__ == "__main__":
    # Small shapes consistent with the module: batch=2, in_channels=4,
    # out_channels=8, spatial 16x16.
    N, Cin, H, W, Cout = 2, 4, 16, 16, 8

    key = jax.random.PRNGKey(0)
    kx, kw, kb = jax.random.split(key, 3)

    x = jax.random.normal(kx, (N, Cin, H, W), dtype=jnp.float32)
    # Deterministic synthetic parameters (not a checkpoint).
    weight = jax.random.normal(kw, (Cout, Cin), dtype=jnp.float32) * 0.1
    bias = jax.random.normal(kb, (Cout,), dtype=jnp.float32) * 0.1

    out = detect_forward(x, weight, bias)
    out = jax.block_until_ready(out)

    # Reference: 1x1 conv + permute, in plain JAX.
    ref = jnp.einsum("nchw,oc->nhwo", x, weight) + bias.reshape(1, 1, 1, Cout)

    assert out.shape == (N, H, W, Cout), out.shape
    assert jnp.allclose(out, ref, atol=1e-5, rtol=1e-5), "mismatch vs reference"

    print("KERNEL_OK")
</pallas_src>

<mosaic_0001>
module attributes {stable_mosaic.version = 11 : i64} {
  func.func @kernel(%arg0: i32, %arg1: i32, %arg2: memref<1x4x256xf32, #tpu.memory_space<vmem>>, %arg3: memref<8x4xf32, #tpu.memory_space<vmem>>, %arg4: memref<8x1xf32, #tpu.memory_space<vmem>>, %arg5: memref<1x8x256xf32, #tpu.memory_space<vmem>>) attributes {dimension_semantics = [#tpu.dimension_semantics<parallel>, #tpu.dimension_semantics<parallel>], iteration_bounds = array<i64: 2, 1>, scalar_prefetch = 0 : i64, scratch_operands = 0 : i64, tpu.core_type = #tpu.core_type<tc>, window_params = [{transform_indices = @transform_0, window_bounds = array<i64: 1, 4, 256>}, {pipeline_mode = #tpu.pipeline_mode<synchronous>, transform_indices = @transform_1, window_bounds = array<i64: 8, 4>}, {pipeline_mode = #tpu.pipeline_mode<synchronous>, transform_indices = @transform_2, window_bounds = array<i64: 8, 1>}, {transform_indices = @transform_3, window_bounds = array<i64: 1, 8, 256>}]} {
    %c0 = arith.constant 0 : index
    %c0_0 = arith.constant 0 : index
    %c0_1 = arith.constant 0 : index
    %0 = vector.load %arg2[%c0, %c0_0, %c0_1] : memref<1x4x256xf32, #tpu.memory_space<vmem>>, vector<1x4x256xf32>
    %1 = vector.shape_cast %0 : vector<1x4x256xf32> to vector<4x256xf32>
    %c0_2 = arith.constant 0 : index
    %c0_3 = arith.constant 0 : index
    %2 = vector.load %arg3[%c0_2, %c0_3] : memref<8x4xf32, #tpu.memory_space<vmem>>, vector<8x4xf32>
    %c0_4 = arith.constant 0 : index
    %c0_5 = arith.constant 0 : index
    %3 = vector.load %arg4[%c0_4, %c0_5] : memref<8x1xf32, #tpu.memory_space<vmem>>, vector<8x1xf32>
    %4 = vector.shape_cast %3 : vector<8x1xf32> to vector<8x1xf32>
    %5 = vector.broadcast %4 : vector<8x1xf32> to vector<8x256xf32>
    %6 = vector.extract_strided_slice %2 {offsets = [0, 0], sizes = [8, 1], strides = [1, 1]} : vector<8x4xf32> to vector<8x1xf32>
    %7 = vector.extract_strided_slice %1 {offsets = [0, 0], sizes = [1, 256], strides = [1, 1]} : vector<4x256xf32> to vector<1x256xf32>
    %8 = vector.broadcast %6 : vector<8x1xf32> to vector<8x256xf32>
    %9 = vector.broadcast %7 : vector<1x256xf32> to vector<8x256xf32>
    %10 = arith.mulf %8, %9 : vector<8x256xf32>
    %11 = arith.addf %5, %10 : vector<8x256xf32>
    %12 = vector.extract_strided_slice %2 {offsets = [0, 1], sizes = [8, 1], strides = [1, 1]} : vector<8x4xf32> to vector<8x1xf32>
    %13 = vector.extract_strided_slice %1 {offsets = [1, 0], sizes = [1, 256], strides = [1, 1]} : vector<4x256xf32> to vector<1x256xf32>
    %14 = vector.broadcast %12 : vector<8x1xf32> to vector<8x256xf32>
    %15 = vector.broadcast %13 : vector<1x256xf32> to vector<8x256xf32>
    %16 = arith.mulf %14, %15 : vector<8x256xf32>
    %17 = arith.addf %11, %16 : vector<8x256xf32>
    %18 = vector.extract_strided_slice %2 {offsets = [0, 2], sizes = [8, 1], strides = [1, 1]} : vector<8x4xf32> to vector<8x1xf32>
    %19 = vector.extract_strided_slice %1 {offsets = [2, 0], sizes = [1, 256], strides = [1, 1]} : vector<4x256xf32> to vector<1x256xf32>
    %20 = vector.broadcast %18 : vector<8x1xf32> to vector<8x256xf32>
    %21 = vector.broadcast %19 : vector<1x256xf32> to vector<8x256xf32>
    %22 = arith.mulf %20, %21 : vector<8x256xf32>
    %23 = arith.addf %17, %22 : vector<8x256xf32>
    %24 = vector.extract_strided_slice %2 {offsets = [0, 3], sizes = [8, 1], strides = [1, 1]} : vector<8x4xf32> to vector<8x1xf32>
    %25 = vector.extract_strided_slice %1 {offsets = [3, 0], sizes = [1, 256], strides = [1, 1]} : vector<4x256xf32> to vector<1x256xf32>
    %26 = vector.broadcast %24 : vector<8x1xf32> to vector<8x256xf32>
    %27 = vector.broadcast %25 : vector<1x256xf32> to vector<8x256xf32>
    %28 = arith.mulf %26, %27 : vector<8x256xf32>
    %29 = arith.addf %23, %28 : vector<8x256xf32>
    %c0_6 = arith.constant 0 : index
    %c0_7 = arith.constant 0 : index
    %c0_8 = arith.constant 0 : index
    %30 = vector.load %arg5[%c0_6, %c0_7, %c0_8] : memref<1x8x256xf32, #tpu.memory_space<vmem>>, vector<1x8x256xf32>
    %31 = vector.shape_cast %30 : vector<1x8x256xf32> to vector<8x256xf32>
    %32 = vector.shape_cast %29 : vector<8x256xf32> to vector<1x8x256xf32>
    tpu.vector_store %arg5[%c0_6, %c0_7, %c0_8], %32 {strides = array<i32>} : memref<1x8x256xf32, #tpu.memory_space<vmem>>, vector<1x8x256xf32>,
    return
  }
  func.func @transform_0(%arg0: i32, %arg1: i32) -> (i32, i32, i32) {
    %c0_i32 = arith.constant 0 : i32
    %c0_i32_0 = arith.constant 0 : i32
    return %arg0, %c0_i32, %arg1 : i32, i32, i32
  }
  func.func @transform_1(%arg0: i32, %arg1: i32) -> (i32, i32) {
    %c0_i32 = arith.constant 0 : i32
    %c0_i32_0 = arith.constant 0 : i32
    %c0_i32_1 = arith.constant 0 : i32
    return %c0_i32, %c0_i32_0 : i32, i32
  }
  func.func @transform_2(%arg0: i32, %arg1: i32) -> (i32, i32) {
    %c0_i32 = arith.constant 0 : i32
    %c0_i32_0 = arith.constant 0 : i32
    %c0_i32_1 = arith.constant 0 : i32
    return %c0_i32, %c0_i32_0 : i32, i32
  }
  func.func @transform_3(%arg0: i32, %arg1: i32) -> (i32, i32, i32) {
    %c0_i32 = arith.constant 0 : i32
    %c0_i32_0 = arith.constant 0 : i32
    return %arg0, %c0_i32, %arg1 : i32, i32, i32
  }
}

</mosaic_0001>

<llo_original>
// kernel: tpu_custom_call.1
$region0: #{tpu_custom_call.1}
  #allocation0 [shape = 'u32[]', space=smem, size = 0x4, offset = 0x4, fixed_abs, tag = 'smem constant byte address 0x4 - core index']
  #allocation1 [shape = 'u32[144,128]{1,0:T(1,128)}', space=vmem, size = 0x12000, scoped, tag = 'internal scratch']
  %s0 = inlined_call_operand.vmem [shape: f32[2,4,256], index: 0, kind: input, shape index: {}]
  %s1 = inlined_call_operand.vmem [shape: f32[8,4], index: 1, kind: input, shape index: {}]
  %s2 = inlined_call_operand.vmem [shape: f32[8,1], index: 2, kind: input, shape index: {}]
  %s3 = inlined_call_operand.hbm [shape: f32[2,8,256], index: 3, kind: output, shape index: {}]
  %s4 = sld [smem:[#allocation0]]
  $region45: #{tpu_custom_call.1} parent=0
    _
  %s6 = ssub.s32 1, %s4
  %s7 = scalar_select 0, %s6, %s4
  $region1: #{tpu_custom_call.1} parent=0
    #allocation2 [shape = 'u8[16384]{0}', space=vmem, size = 0x4000, scoped, tag = 'output window, operand 0']
    #allocation3 [shape = 's32[2]{0}', space=sflag, size = 0x8, scoped, tag = 'scoped memory for tpu_custom_call.1']
    %8 = vsyncpa [#allocation3], 0
    %s9 = scalar_lea.sflag [#allocation3], 1
    %10 = vsyncpa %s9, 0
    loop: start=0, step=1, limit=4
    $region2: #{tpu_custom_call.1} parent=1 // loop_pre_header
      _
    $region3: #{tpu_custom_call.1} parent=1 // loop_header
      %s12 = sphi 0, %s16
      %p13 = scmp.ge.s32.totalorder %s12, 4
      %s19 = sphi 0, %s31
      %s20 = sphi 0, %s27
      %s21 = sphi 0, %s19
      %s22 = sphi 0, %s20
      %s23 = sphi 0, %s21
      %s24 = sphi 0, %s22
      %s36 = sphi 0, %s38
      %s39 = sphi 0, %s36
      %s40 = sphi 0, %s39
      %s56 = sphi 0, %s40
      %s60 = sphi 0, %s60
      %s62 = sphi 0, %s60
      %s63 = sphi 0, %s62
      %s77 = sphi 0, %s63
      %s81 = sphi 0, %s81
      %s83 = sphi 0, %s81
      %s84 = sphi 0, %s83
      %s98 = sphi 0, %s84
      %s106 = sphi 0, %s108
      %s109 = sphi 0, %s106
      %s110 = sphi 0, %s109
      %s126 = sphi 0, %s110
    $region4: #{tpu_custom_call.1} parent=1 // loop_header_branch
      %15 = sbr.rel (%p13) target = $region8
    $region5: #{tpu_custom_call.1} parent=1 // loop_body
      %s17 = ssub.s32 %s12, 1
      %s18 = ssub.s32 %s12, 2
      %s25 = sadd.s32 1, %s20
      %p26 = scmp.ge.s32.totalorder %s25, 1
      %s27 = scalar_select %p26, 0, %s25
      %s28 = sadd.s32 1, %s19
      %s29 = scalar_select %p26, %s28, %s19
      %p30 = scmp.ge.s32.totalorder %s29, 2
      %s31 = scalar_select %p30, 0, %s29
      %s32 = ssub.s32 %s19, %s31
      %s33 = ssub.s32 %s20, %s27
      %s34 = sor.u32 %s32, %s33
      %p35 = scmp.eq.s32.totalorder %s34, 0
      %s37 = sadd.s32 %s36, 1
      %s38 = scalar_select %p35, %s36, %s37
      %p41 = pneg %p35
      %p42 = scmp.eq.s32.totalorder %s12, 1
      %p43 = por %p41, %p42
      %p44 = scmp.ne.s32.totalorder %s36, %s39
      %p45 = scmp.eq.s32.totalorder %s12, 0
      %p46 = por %p44, %p45
      %p47 = scmp.ne.s32.totalorder %s36, %s39
      %p48 = scmp.eq.s32.totalorder %s17, 1
      %p49 = por %p47, %p48
      %p50 = scmp.ne.s32.totalorder %s39, %s40
      %p51 = scmp.eq.s32.totalorder %s17, 0
      %p52 = por %p50, %p51
      %p53 = scmp.ne.s32.totalorder %s39, %s40
      %p54 = scmp.eq.s32.totalorder %s18, 1
      %p55 = por %p53, %p54
      %p57 = scmp.ne.s32.totalorder %s40, %s56
      %p58 = scmp.eq.s32.totalorder %s18, 0
      %p59 = por %p57, %p58
      %s61 = sadd.s32 %s60, 1
      %p64 = scmp.eq.s32.totalorder %s12, 1
      %p65 = scmp.ne.s32.totalorder %s60, %s62
      %p66 = scmp.eq.s32.totalorder %s12, 0
      %p67 = por %p65, %p66
      %p68 = scmp.ne.s32.totalorder %s60, %s62
      %p69 = scmp.eq.s32.totalorder %s17, 1
      %p70 = por %p68, %p69
      %p71 = scmp.ne.s32.totalorder %s62, %s63
      %p72 = scmp.eq.s32.totalorder %s17, 0
      %p73 = por %p71, %p72
      %p74 = scmp.ne.s32.totalorder %s62, %s63
      %p75 = scmp.eq.s32.totalorder %s18, 1
      %p76 = por %p74, %p75
      %p78 = scmp.ne.s32.totalorder %s63, %s77
      %p79 = scmp.eq.s32.totalorder %s18, 0
      %p80 = por %p78, %p79
      %s82 = sadd.s32 %s81, 1
      %p85 = scmp.eq.s32.totalorder %s12, 1
      %p86 = scmp.ne.s32.totalorder %s81, %s83
      %p87 = scmp.eq.s32.totalorder %s12, 0
      %p88 = por %p86, %p87
      %p89 = scmp.ne.s32.totalorder %s81, %s83
      %p90 = scmp.eq.s32.totalorder %s17, 1
      %p91 = por %p89, %p90
      %p92 = scmp.ne.s32.totalorder %s83, %s84
      %p93 = scmp.eq.s32.totalorder %s17, 0
      %p94 = por %p92, %p93
      %p95 = scmp.ne.s32.totalorder %s83, %s84
      %p96 = scmp.eq.s32.totalorder %s18, 1
      %p97 = por %p95, %p96
      %p99 = scmp.ne.s32.totalorder %s84, %s98
      %p100 = scmp.eq.s32.totalorder %s18, 0
      %p101 = por %p99, %p100
      %s102 = ssub.s32 %s19, %s31
      %s103 = ssub.s32 %s20, %s27
      %s104 = sor.u32 %s102, %s103
      %p105 = scmp.eq.s32.totalorder %s104, 0
      %s107 = sadd.s32 %s106, 1
      %s108 = scalar_select %p105, %s106, %s107
      %p111 = pneg %p105
      %p112 = scmp.eq.s32.totalorder %s12, 1
      %p113 = por %p111, %p112
      %p114 = scmp.ne.s32.totalorder %s106, %s109
      %p115 = scmp.eq.s32.totalorder %s12, 0
      %p116 = por %p114, %p115
      %p117 = scmp.ne.s32.totalorder %s106, %s109
      %p118 = scmp.eq.s32.totalorder %s17, 1
      %p119 = por %p117, %p118
      %p120 = scmp.ne.s32.totalorder %s109, %s110
      %p121 = scmp.eq.s32.totalorder %s17, 0
      %p122 = por %p120, %p121
      %p123 = scmp.ne.s32.totalorder %s109, %s110
      %p124 = scmp.eq.s32.totalorder %s18, 1
      %p125 = por %p123, %p124
      %p127 = scmp.ne.s32.totalorder %s110, %s126
      %p128 = scmp.eq.s32.totalorder %s18, 0
      %p129 = por %p127, %p128
      %p130 = scmp.le.s32.totalorder 1, %s12
      %p131 = scmp.lt.s32.totalorder %s12, 3
      %p132 = pnand %p130, %p131
      %p133 = pneg %p132
      // Predicated region
      $region9: #{tpu_custom_call.1} parent=5 // pred_check
        _
      $region10: #{tpu_custom_call.1} parent=5 // pred_check_branch
        %135 = sbr.rel (%p132) target = $region12
      $region11: #{tpu_custom_call.1} parent=5 // pred_region
        %s136 = ssub.s32 %s12, 1
        // Predicated region
        $region13: #{tpu_custom_call.1} parent=11 // pred_check
          %p137 = pneg %p73
        $region14: #{tpu_custom_call.1} parent=11 // pred_check_branch
          %139 = sbr.rel (%p137) target = $region16
        $region15: #{tpu_custom_call.1} parent=11 // pred_region
          _
        $region16: #{tpu_custom_call.1} parent=11 // pred_fallthru
          _
        // Predicated region
        $region17: #{tpu_custom_call.1} parent=11 // pred_check
          %p140 = pneg %p94
        $region18: #{tpu_custom_call.1} parent=11 // pred_check_branch
          %142 = sbr.rel (%p140) target = $region20
        $region19: #{tpu_custom_call.1} parent=11 // pred_region
          _
        $region20: #{tpu_custom_call.1} parent=11 // pred_fallthru
          _
      $region12: #{tpu_custom_call.1} parent=5 // pred_fallthru
        _
      %p143 = scmp.lt.s32.totalorder %s12, 2
      // Predicated region
      $region21: #{tpu_custom_call.1} parent=5 // pred_check
        %p144 = pneg %p143
      $region22: #{tpu_custom_call.1} parent=5 // pred_check_branch
        %146 = sbr.rel (%p144) target = $region24
      $region23: #{tpu_custom_call.1} parent=5 // pred_region
        // Predicated region
        $region25: #{tpu_custom_call.1} parent=23 // pred_check
          %p147 = pneg %p46
        $region26: #{tpu_custom_call.1} parent=23 // pred_check_branch
          %149 = sbr.rel (%p147) target = $region28
        $region27: #{tpu_custom_call.1} parent=23 // pred_region
          %s150 = smul.u32 2, %s20
          %p151 = scmp.lt.s32.totalorder %s19, 1
          %s152 = scalar_select %p151, %s19, 1
          %p153 = scmp.lt.s32.totalorder %s150, 1
          %s154 = scalar_select %p153, %s150, 1
          %s155 = smul.addr %s152, 2
          %s156 = sadd.s32 %s154, %s155
          %s157 = smul.addr %s156, 4
          %s158 = scalar_lea.vmem %s0, %s157
          %s159 = smul.u32 2, %s20
        $region28: #{tpu_custom_call.1} parent=23 // pred_fallthru
          _
      $region24: #{tpu_custom_call.1} parent=5 // pred_fallthru
        _
      %p160 = scmp.le.s32.totalorder 1, %s12
      %p161 = scmp.lt.s32.totalorder %s12, 3
      %p162 = pnand %p160, %p161
      %p163 = pneg %p162
      // Predicated region
      $region29: #{tpu_custom_call.1} parent=5 // pred_check
        _
      $region30: #{tpu_custom_call.1} parent=5 // pred_check_branch
        %165 = sbr.rel (%p162) target = $region32
      $region31: #{tpu_custom_call.1} parent=5 // pred_region
        %s166 = ssub.s32 %s12, 1
        %s167 = smul.u32 2, %s22
        %p168 = scmp.lt.s32.totalorder %s21, 1
        %s169 = scalar_select %p168, %s21, 1
        %p170 = scmp.lt.s32.totalorder %s167, 1
        %s171 = scalar_select %p170, %s167, 1
        %s172 = smul.addr %s169, 2
        %s173 = sadd.s32 %s171, %s172
        %s174 = smul.addr %s173, 4
        %s175 = scalar_lea.vmem %s0, %s174
        %p176 = pneg %p52
        %p177 = pneg %p49
        %p178 = pneg %p73
        %p179 = pneg %p70
        %p180 = pneg %p94
        %p181 = pneg %p91
        %p182 = pneg %p122
        %p183 = pneg %p119
        %s184 = sand.u32 %s109, 1
        %s185 = scalar_lea.sflag [#allocation3], %s184
        %s186 = sand.u32 %s109, 1
        %s187 = smul.addr %s186, 16
        %s188 = scalar_lea.vmem [#allocation2], %s187
        %s189 = smul.u32 2, %s22
        %p190 = scmp.lt.s32.totalorder %s21, 1
        %s191 = scalar_select %p190, %s21, 1
        %p192 = scmp.lt.s32.totalorder %s189, 1
        %s193 = scalar_select %p192, %s189, 1
        %s194 = smul.addr %s191, 2
        %s195 = sadd.s32 %s193, %s194
        %s196 = smul.addr %s195, 4
        %s197 = scalar_lea.vmem %s0, %s196
        %s198 = smul.u32 2, %s22
        %s199 = smul.u32 2, %s22
        %v200 = vld [vmem:[%s197] sm:$0xff]
        %v201 = vld [vmem:[%s1] sm:$0xff]
        %v202 = vld [vmem:[%s2] sm:$0xff]
        %204 = vset.pattern.permute.xlu0 0
        %205 = vperm.xlu0 %204, %v202
        %v206 = vpop.permute.xlu0 %205
        %209 = vset.pattern.permute.xlu0 0
        %210 = vperm.xlu0 %209, %v201
        %v211 = vpop.permute.xlu0 %210
        %v214 = vlaneseq
        %v215 = vshrl.u32 %v214, 7
        %v216 = vsub.s32 0, %v215
        %v217 = vrot.slane %v200, %v216
        %v218 = vlaneseq
        %v219 = vshrl.u32 %v218, 7
        %v220 = vsub.s32 4, %v219
        %v221 = vrot.slane %v200, %v220
        %v224 = vlaneseq
        %v225 = vshrl.u32 %v224, 7
        %v226 = vsub.s32 0, %v225
        %v227 = vrot.slane %v217, %v226
        %v228 = vlaneseq
        %v229 = vshrl.u32 %v228, 7
        %v230 = vsub.s32 0, %v229
        %v231 = vrot.slane %v221, %v230
        %v232 = vmul.f32 %v211, %v227
        %v233 = vmul.f32 %v211, %v231
        %v234 = vadd.f32 %v206, %v232
        %v235 = vadd.f32 %v206, %v233
        %236 = vset.pattern.permute.xlu0 1
        %237 = vperm.xlu0 %236, %v201
        %v238 = vpop.permute.xlu0 %237
        %v240 = vlaneseq
        %v241 = vshrl.u32 %v240, 7
        %v242 = vsub.s32 1, %v241
        %v243 = vrot.slane %v200, %v242
        %v244 = vlaneseq
        %v245 = vshrl.u32 %v244, 7
        %v246 = vsub.s32 5, %v245
        %v247 = vrot.slane %v200, %v246
        %v250 = vlaneseq
        %v251 = vshrl.u32 %v250, 7
        %v252 = vsub.s32 1, %v251
        %v253 = vrot.slane %v243, %v252
        %v254 = vlaneseq
        %v255 = vshrl.u32 %v254, 7
        %v256 = vsub.s32 1, %v255
        %v257 = vrot.slane %v247, %v256
        %v258 = vmul.f32 %v238, %v253
        %v259 = vmul.f32 %v238, %v257
        %v260 = vadd.f32 %v234, %v258
        %v261 = vadd.f32 %v235, %v259
        %262 = vset.pattern.permute.xlu0 2
        %263 = vperm.xlu0 %262, %v201
        %v264 = vpop.permute.xlu0 %263
        %v266 = vlaneseq
        %v267 = vshrl.u32 %v266, 7
        %v268 = vsub.s32 2, %v267
        %v269 = vrot.slane %v200, %v268
        %v270 = vlaneseq
        %v271 = vshrl.u32 %v270, 7
        %v272 = vsub.s32 6, %v271
        %v273 = vrot.slane %v200, %v272
        %v276 = vlaneseq
        %v277 = vshrl.u32 %v276, 7
        %v278 = vsub.s32 2, %v277
        %v279 = vrot.slane %v269, %v278
        %v280 = vlaneseq
        %v281 = vshrl.u32 %v280, 7
        %v282 = vsub.s32 2, %v281
        %v283 = vrot.slane %v273, %v282
        %v284 = vmul.f32 %v264, %v279
        %v285 = vmul.f32 %v264, %v283
        %v286 = vadd.f32 %v260, %v284
        %v287 = vadd.f32 %v261, %v285
        %288 = vset.pattern.permute.xlu0 3
        %289 = vperm.xlu0 %288, %v201
        %v290 = vpop.permute.xlu0 %289
        %v292 = vlaneseq
        %v293 = vshrl.u32 %v292, 7
        %v294 = vsub.s32 3, %v293
        %v295 = vrot.slane %v200, %v294
        %v296 = vlaneseq
        %v297 = vshrl.u32 %v296, 7
        %v298 = vsub.s32 7, %v297
        %v299 = vrot.slane %v200, %v298
        %v302 = vlaneseq
        %v303 = vshrl.u32 %v302, 7
        %v304 = vsub.s32 3, %v303
        %v305 = vrot.slane %v295, %v304
        %v306 = vlaneseq
        %v307 = vshrl.u32 %v306, 7
        %v308 = vsub.s32 3, %v307
        %v309 = vrot.slane %v299, %v308
        %v310 = vmul.f32 %v290, %v305
        %v311 = vmul.f32 %v290, %v309
        %v312 = vadd.f32 %v286, %v310
        %v313 = vadd.f32 %v287, %v311
        %314 = vst [vmem:[%s188] sm:$0xff] %v312
        %315 = vst [vmem:[%s188 + $0x8] sm:$0xff] %v313
        %s316 = sand.u32 %s109, 1
        %s317 = scalar_lea.sflag [#allocation3], %s316
        %s318 = sand.u32 %s109, 1
        %s319 = smul.addr %s318, 16
        %s320 = scalar_lea.vmem [#allocation2], %s319
        // Predicated region
        $region33: #{tpu_custom_call.1} parent=31 // pred_check
          %p321 = pneg %p119
        $region34: #{tpu_custom_call.1} parent=31 // pred_check_branch
          %323 = sbr.rel (%p321) target = $region36
        $region35: #{tpu_custom_call.1} parent=31 // pred_region
          %s324 = smul.u32 2, %s22
          %s326 = ssub.s32 256, 256
          %327 = vsyncadd %s317, %s326
          %s328 = smul.addr %s21, 2
          %s329 = sadd.s32 %s324, %s328
          %s330 = smul.addr %s329, 128
          %s331 = scalar_lea.hbm %s3, %s330
          %s333 = sshll.u32 %s320, 4
          %s334 = int_to_ptr.vmem [resolvable:$true] %s333
          %336 = dma.vmem_to_hbm [thread:$0]  %s334, 256, %s331, %s317
        $region36: #{tpu_custom_call.1} parent=31 // pred_fallthru
          _
      $region32: #{tpu_custom_call.1} parent=5 // pred_fallthru
        _
      %p337 = scmp.le.s32.totalorder 2, %s12
      // Predicated region
      $region37: #{tpu_custom_call.1} parent=5 // pred_check
        %p338 = pneg %p337
      $region38: #{tpu_custom_call.1} parent=5 // pred_check_branch
        %340 = sbr.rel (%p338) target = $region40
      $region39: #{tpu_custom_call.1} parent=5 // pred_region
        %s341 = ssub.s32 %s12, 2
        // Predicated region
        $region41: #{tpu_custom_call.1} parent=39 // pred_check
          %p342 = pneg %p125
        $region42: #{tpu_custom_call.1} parent=39 // pred_check_branch
          %344 = sbr.rel (%p342) target = $region44
        $region43: #{tpu_custom_call.1} parent=39 // pred_region
          %s345 = sand.u32 %s110, 1
          %s346 = scalar_lea.sflag [#allocation3], %s345
          %s347 = sand.u32 %s110, 1
          %s348 = smul.addr %s347, 16
          %s349 = scalar_lea.vmem [#allocation2], %s348
          %350 = dma.done %s346, 256
        $region44: #{tpu_custom_call.1} parent=39 // pred_fallthru
          _
      $region40: #{tpu_custom_call.1} parent=5 // pred_fallthru
        _
    $region6: #{tpu_custom_call.1} parent=1 // loop_footer
      %s16 = sadd.s32 1, %s12
    $region7: #{tpu_custom_call.1} parent=1 // loop_footer_branch
      %11 = sbr.rel target = $region3
    $region8: #{tpu_custom_call.1} parent=1 // loop_exit
      _
    %351 = vsyncpa [#allocation3], 1
    %s352 = scalar_lea.sflag [#allocation3], 1
    %353 = vsyncpa %s352, 1

</llo_original>
